<compile_context>
chip_gen: v7x
topology: tpu7x:2x2x1
jax: 0.10.0
libtpu: 0.0.40
codegen_flags: <defaults>
</compile_context>

<pallas_src>
import jax
import jax.numpy as jnp
from jax.experimental import pallas as pl
from jax.experimental.pallas import tpu as pltpu


def _round_up8(n):
    return ((n + 7) // 8) * 8


def _pick_batch_block(B, row_bytes, target_bytes=1 << 20):
    """Largest multiple-of-8 divisor of B whose block stays <= target_bytes."""
    best = None
    bb = 8
    while bb <= B and bb * row_bytes <= target_bytes:
        if B % bb == 0:
            best = bb
        bb += 8
    return best if best is not None else B


def make_hierarchical_attention(w1b, w2b, w1c, w2c, F, *, batch_block=None):
    """Builds the forward closure.  Weight packing happens ONCE, here.

    Weights in PyTorch nn.Linear orientation (bias-free):
      w1b (H1, Band), w2b (Band, H1)   -- band SE      (H1 = Band // 2)
      w1c (H2, C),    w2c (C, H2)      -- channel SE   (H2 = C // reduction)
    Returns forward(x): (B, C, F, Band) -> (B, C, F*Band).
    """
    H1, Band = w1b.shape
    C, H2 = w2c.shape
    FB = F * Band
    CFB = C * FB

    inv_CF = 1.0 / float(C * F)      # band GAP normalizer (mean over c, f)
    inv_FB = 1.0 / float(FB)         # channel GAP normalizer (mean over f, band)

    # Pre-broadcast every SE weight along the flattened j = c*F*Band + f*Band + band
    # axis so the kernel only ever does full-lane multiplies / lane reductions.
    w1b_full = jnp.tile(w1b.astype(jnp.float32), (1, C * F)) * inv_CF    # [h,j] = w1b[h, j%Band]/(C*F)
    w2b_full = jnp.tile(w2b.T.astype(jnp.float32), (1, C * F))           # [h,j] = w2b[j%Band, h]
    w1c_full = jnp.repeat(w1c.astype(jnp.float32), FB, axis=1) * inv_FB  # [k,j] = w1c[k, j//FB]/FB
    w2c_full = jnp.repeat(w2c.T.astype(jnp.float32), FB, axis=1)         # [k,j] = w2c[j//FB, k]

    # One packed tile; each section starts on an 8-row sublane boundary.
    r_w1b = 0
    r_w2b = r_w1b + _round_up8(H1)
    r_w1c = r_w2b + _round_up8(H1)
    r_w2c = r_w1c + _round_up8(H2)
    rows = r_w2c + _round_up8(H2)
    packed = jnp.zeros((rows, CFB), jnp.float32)
    packed = packed.at[r_w1b:r_w1b + H1].set(w1b_full)
    packed = packed.at[r_w2b:r_w2b + H1].set(w2b_full)
    packed = packed.at[r_w1c:r_w1c + H2].set(w1c_full)
    packed = packed.at[r_w2c:r_w2c + H2].set(w2c_full)
    packed = jax.device_put(packed)          # materialized once, reused every call

    def kernel(x_ref, w_ref, o_ref):
        xb = x_ref[...]                                            # (bb, CFB)

        # ---------- band SE (scale depends only on band = j % Band) ----------
        y1_logit = None
        for h in range(H1):                                        # tiny, static unroll
            w1row = w_ref[r_w1b + h:r_w1b + h + 1, :]              # (1, CFB), inv_CF folded
            h1 = jnp.maximum(jnp.sum(xb * w1row, axis=1, keepdims=True), 0.0)   # (bb, 1)
            term = h1 * w_ref[r_w2b + h:r_w2b + h + 1, :]          # (bb, CFB)
            y1_logit = term if y1_logit is None else y1_logit + term
        x1 = xb * jax.nn.sigmoid(y1_logit)                         # (bb, CFB)

        # -------- channel SE (scale depends only on channel = j // FB) --------
        y2_logit = None
        for k in range(H2):
            w1row = w_ref[r_w1c + k:r_w1c + k + 1, :]              # (1, CFB), inv_FB folded
            h2 = jnp.maximum(jnp.sum(x1 * w1row, axis=1, keepdims=True), 0.0)   # (bb, 1)
            term = h2 * w_ref[r_w2c + k:r_w2c + k + 1, :]          # (bb, CFB)
            y2_logit = term if y2_logit is None else y2_logit + term

        # single lane-dense, full-tile store
        o_ref[...] = (x1 * jax.nn.sigmoid(y2_logit)).astype(o_ref.dtype)

    @jax.jit
    def forward(x):
        B = x.shape[0]
        assert x.shape[1:] == (C, F, Band), x.shape
        bb = batch_block if batch_block is not None else _pick_batch_block(B, CFB * 4)
        assert B % bb == 0, "batch_block must divide B"
        nb = B // bb

        x2d = x.reshape(B, CFB)              # free contiguous collapse -> lane dense

        out = pl.pallas_call(
            kernel,
            out_shape=jax.ShapeDtypeStruct((B, CFB), x.dtype),
            grid=(nb,),
            in_specs=[
                pl.BlockSpec((bb, CFB), lambda i: (i, 0)),
                pl.BlockSpec((rows, CFB), lambda i: (0, 0)),   # weights resident
            ],
            out_specs=pl.BlockSpec((bb, CFB), lambda i: (i, 0)),
            compiler_params=pltpu.CompilerParams(
                dimension_semantics=("parallel",)),
        )(x2d, packed)
        return out.reshape(B, C, FB)         # free contiguous split -> (B, C, F*Band)

    return forward


def reference(x, w1b, w2b, w1c, w2c):
    """Pure-JAX reference mirroring the PyTorch forward."""
    B, C, F, Band = x.shape
    bm = jnp.mean(x, axis=(1, 2))                  # (B, Band)
    h1 = jax.nn.relu(bm @ w1b.T)                   # (B, H1)
    y1 = jax.nn.sigmoid(h1 @ w2b.T)                # (B, Band)
    x1 = x * y1[:, None, None, :]
    cm = jnp.mean(x1, axis=(2, 3))                 # (B, C)
    h2 = jax.nn.relu(cm @ w1c.T)                   # (B, H2)
    y2 = jax.nn.sigmoid(h2 @ w2c.T)                # (B, C)
    x2 = x1 * y2[:, :, None, None]
    return x2.reshape(B, C, F * Band)


if __name__ == "__main__":
    # args: bands=5, channels_num=4, se_squeeze_ratio=2, feature=16, batch=2
    B, C, F, Band = 2, 4, 16, 5
    se_squeeze_ratio = 2
    H1 = Band // 2                           # band SE hidden (reduction=2)
    H2 = C // (C // se_squeeze_ratio)        # channel SE hidden

    key = jax.random.PRNGKey(0)
    kx, k1, k2, k3, k4 = jax.random.split(key, 5)
    x = jax.random.normal(kx, (B, C, F, Band), dtype=jnp.float32)
    w1b = 0.5 * jax.random.normal(k1, (H1, Band), dtype=jnp.float32)
    w2b = 0.5 * jax.random.normal(k2, (Band, H1), dtype=jnp.float32)
    w1c = 0.5 * jax.random.normal(k3, (H2, C), dtype=jnp.float32)
    w2c = 0.5 * jax.random.normal(k4, (C, H2), dtype=jnp.float32)

    # Weight packing happens once here, outside the per-call forward path.
    forward = make_hierarchical_attention(w1b, w2b, w1c, w2c, F)

    out = forward(x)
    out = jax.block_until_ready(out)

    ref = reference(x, w1b, w2b, w1c, w2c)
    assert out.shape == (B, C, F * Band), out.shape
    assert jnp.allclose(out, ref, rtol=1e-4, atol=1e-4), \
        float(jnp.max(jnp.abs(out - ref)))
    print("KERNEL_OK")
</pallas_src>

<mosaic_0001>
module attributes {stable_mosaic.version = 11 : i64} {
  func.func @kernel(%arg0: i32, %arg1: memref<2x320xf32, #tpu.memory_space<vmem>>, %arg2: memref<32x320xf32, #tpu.memory_space<vmem>>, %arg3: memref<2x320xf32, #tpu.memory_space<vmem>>) attributes {dimension_semantics = [#tpu.dimension_semantics<parallel>], iteration_bounds = array<i64: 1>, scalar_prefetch = 0 : i64, scratch_operands = 0 : i64, tpu.core_type = #tpu.core_type<tc>, window_params = [{transform_indices = @transform_0, window_bounds = array<i64: 2, 320>}, {pipeline_mode = #tpu.pipeline_mode<synchronous>, transform_indices = @transform_1, window_bounds = array<i64: 32, 320>}, {transform_indices = @transform_2, window_bounds = array<i64: 2, 320>}]} {
    %c0 = arith.constant 0 : index
    %c0_0 = arith.constant 0 : index
    %0 = vector.load %arg1[%c0, %c0_0] : memref<2x320xf32, #tpu.memory_space<vmem>>, vector<2x320xf32>
    %c0_1 = arith.constant 0 : index
    %c0_2 = arith.constant 0 : index
    %1 = vector.load %arg2[%c0_1, %c0_2] : memref<32x320xf32, #tpu.memory_space<vmem>>, vector<1x320xf32>
    %2 = vector.broadcast %1 : vector<1x320xf32> to vector<2x320xf32>
    %3 = arith.mulf %0, %2 : vector<2x320xf32>
    %cst = arith.constant dense<0.000000e+00> : vector<2xf32>
    %4 = vector.multi_reduction <add>, %3, %cst [1] : vector<2x320xf32> to vector<2xf32>
    %5 = vector.shape_cast %4 : vector<2xf32> to vector<2x1xf32>
    %cst_3 = arith.constant 0.000000e+00 : f32
    %6 = vector.broadcast %cst_3 : f32 to vector<2x1xf32>
    %7 = arith.maximumf %5, %6 : vector<2x1xf32>
    %c8 = arith.constant 8 : index
    %c0_4 = arith.constant 0 : index
    %8 = vector.load %arg2[%c8, %c0_4] : memref<32x320xf32, #tpu.memory_space<vmem>>, vector<1x320xf32>
    %9 = vector.broadcast %7 : vector<2x1xf32> to vector<2x320xf32>
    %10 = vector.broadcast %8 : vector<1x320xf32> to vector<2x320xf32>
    %11 = arith.mulf %9, %10 : vector<2x320xf32>
    %c1 = arith.constant 1 : index
    %c0_5 = arith.constant 0 : index
    %12 = vector.load %arg2[%c1, %c0_5] : memref<32x320xf32, #tpu.memory_space<vmem>>, vector<1x320xf32>
    %13 = vector.broadcast %12 : vector<1x320xf32> to vector<2x320xf32>
    %14 = arith.mulf %0, %13 : vector<2x320xf32>
    %cst_6 = arith.constant dense<0.000000e+00> : vector<2xf32>
    %15 = vector.multi_reduction <add>, %14, %cst_6 [1] : vector<2x320xf32> to vector<2xf32>
    %16 = vector.shape_cast %15 : vector<2xf32> to vector<2x1xf32>
    %cst_7 = arith.constant 0.000000e+00 : f32
    %17 = vector.broadcast %cst_7 : f32 to vector<2x1xf32>
    %18 = arith.maximumf %16, %17 : vector<2x1xf32>
    %c9 = arith.constant 9 : index
    %c0_8 = arith.constant 0 : index
    %19 = vector.load %arg2[%c9, %c0_8] : memref<32x320xf32, #tpu.memory_space<vmem>>, vector<1x320xf32>
    %20 = vector.broadcast %18 : vector<2x1xf32> to vector<2x320xf32>
    %21 = vector.broadcast %19 : vector<1x320xf32> to vector<2x320xf32>
    %22 = arith.mulf %20, %21 : vector<2x320xf32>
    %23 = arith.addf %11, %22 : vector<2x320xf32>
    %24 = arith.negf %23 : vector<2x320xf32>
    %25 = math.exp %24 : vector<2x320xf32>
    %cst_9 = arith.constant 1.000000e+00 : f32
    %26 = vector.broadcast %cst_9 : f32 to vector<2x320xf32>
    %27 = arith.addf %26, %25 : vector<2x320xf32>
    %28 = arith.divf %26, %27 : vector<2x320xf32>
    %29 = arith.mulf %0, %28 : vector<2x320xf32>
    %c16 = arith.constant 16 : index
    %c0_10 = arith.constant 0 : index
    %30 = vector.load %arg2[%c16, %c0_10] : memref<32x320xf32, #tpu.memory_space<vmem>>, vector<1x320xf32>
    %31 = vector.broadcast %30 : vector<1x320xf32> to vector<2x320xf32>
    %32 = arith.mulf %29, %31 : vector<2x320xf32>
    %cst_11 = arith.constant dense<0.000000e+00> : vector<2xf32>
    %33 = vector.multi_reduction <add>, %32, %cst_11 [1] : vector<2x320xf32> to vector<2xf32>
    %34 = vector.shape_cast %33 : vector<2xf32> to vector<2x1xf32>
    %cst_12 = arith.constant 0.000000e+00 : f32
    %35 = vector.broadcast %cst_12 : f32 to vector<2x1xf32>
    %36 = arith.maximumf %34, %35 : vector<2x1xf32>
    %c24 = arith.constant 24 : index
    %c0_13 = arith.constant 0 : index
    %37 = vector.load %arg2[%c24, %c0_13] : memref<32x320xf32, #tpu.memory_space<vmem>>, vector<1x320xf32>
    %38 = vector.broadcast %36 : vector<2x1xf32> to vector<2x320xf32>
    %39 = vector.broadcast %37 : vector<1x320xf32> to vector<2x320xf32>
    %40 = arith.mulf %38, %39 : vector<2x320xf32>
    %c17 = arith.constant 17 : index
    %c0_14 = arith.constant 0 : index
    %41 = vector.load %arg2[%c17, %c0_14] : memref<32x320xf32, #tpu.memory_space<vmem>>, vector<1x320xf32>
    %42 = vector.broadcast %41 : vector<1x320xf32> to vector<2x320xf32>
    %43 = arith.mulf %29, %42 : vector<2x320xf32>
    %cst_15 = arith.constant dense<0.000000e+00> : vector<2xf32>
    %44 = vector.multi_reduction <add>, %43, %cst_15 [1] : vector<2x320xf32> to vector<2xf32>
    %45 = vector.shape_cast %44 : vector<2xf32> to vector<2x1xf32>
    %cst_16 = arith.constant 0.000000e+00 : f32
    %46 = vector.broadcast %cst_16 : f32 to vector<2x1xf32>
    %47 = arith.maximumf %45, %46 : vector<2x1xf32>
    %c25 = arith.constant 25 : index
    %c0_17 = arith.constant 0 : index
    %48 = vector.load %arg2[%c25, %c0_17] : memref<32x320xf32, #tpu.memory_space<vmem>>, vector<1x320xf32>
    %49 = vector.broadcast %47 : vector<2x1xf32> to vector<2x320xf32>
    %50 = vector.broadcast %48 : vector<1x320xf32> to vector<2x320xf32>
    %51 = arith.mulf %49, %50 : vector<2x320xf32>
    %52 = arith.addf %40, %51 : vector<2x320xf32>
    %53 = arith.negf %52 : vector<2x320xf32>
    %54 = math.exp %53 : vector<2x320xf32>
    %cst_18 = arith.constant 1.000000e+00 : f32
    %55 = vector.broadcast %cst_18 : f32 to vector<2x320xf32>
    %56 = arith.addf %55, %54 : vector<2x320xf32>
    %57 = arith.divf %55, %56 : vector<2x320xf32>
    %58 = arith.mulf %29, %57 : vector<2x320xf32>
    %c0_19 = arith.constant 0 : index
    %c0_20 = arith.constant 0 : index
    %59 = vector.load %arg3[%c0_19, %c0_20] : memref<2x320xf32, #tpu.memory_space<vmem>>, vector<2x320xf32>
    tpu.vector_store %arg3[%c0_19, %c0_20], %58 {strides = array<i32>} : memref<2x320xf32, #tpu.memory_space<vmem>>, vector<2x320xf32>,
    return
  }
  func.func @transform_0(%arg0: i32) -> (i32, i32) {
    %c0_i32 = arith.constant 0 : i32
    %c0_i32_0 = arith.constant 0 : i32
    return %arg0, %c0_i32 : i32, i32
  }
  func.func @transform_1(%arg0: i32) -> (i32, i32) {
    %c0_i32 = arith.constant 0 : i32
    %c0_i32_0 = arith.constant 0 : i32
    %c0_i32_1 = arith.constant 0 : i32
    return %c0_i32, %c0_i32_0 : i32, i32
  }
  func.func @transform_2(%arg0: i32) -> (i32, i32) {
    %c0_i32 = arith.constant 0 : i32
    %c0_i32_0 = arith.constant 0 : i32
    return %arg0, %c0_i32 : i32, i32
  }
}

</mosaic_0001>

<llo_original>
// kernel: forward.1
$region0: #{forward.1}
  #allocation0 [shape = 'u32[]', space=smem, size = 0x4, offset = 0x4, fixed_abs, tag = 'smem constant byte address 0x4 - core index']
  #allocation1 [shape = 'u32[144,128]{1,0:T(1,128)}', space=vmem, size = 0x12000, scoped, tag = 'internal scratch']
  %s0 = inlined_call_operand.vmem [shape: f32[2,320], index: 0, kind: input, shape index: {}]
  %s1 = inlined_call_operand.vmem [shape: f32[32,320], index: 1, kind: input, shape index: {}]
  %s2 = inlined_call_operand.vmem [shape: f32[2,320], index: 2, kind: output, shape index: {}]
  %s3 = sld [smem:[#allocation0]]
  $region18: #{forward.1} parent=0
    _
  %s5 = ssub.s32 1, %s3
  %s6 = scalar_select 0, %s5, %s3
  // Predicated region
  $region2: #{forward.1} parent=0 // pred_check
    _
  $region3: #{forward.1} parent=0 // pred_check_branch
    %8 = sbr.rel (0) target = $region5
  $region4: #{forward.1} parent=0 // pred_region
    _
  $region5: #{forward.1} parent=0 // pred_fallthru
    _
  // Predicated region
  $region6: #{forward.1} parent=0 // pred_check
    _
  $region7: #{forward.1} parent=0 // pred_check_branch
    %10 = sbr.rel (0) target = $region9
  $region8: #{forward.1} parent=0 // pred_region
    _
  $region9: #{forward.1} parent=0 // pred_fallthru
    _
  %v11 = vld [vmem:[%s0] sm:$0x3f]
  %v12 = vld [vmem:[%s1] ss:$8 sm:$0x7]
  %v14 = vlaneseq
  %v15 = vshrl.u32 %v14, 7
  %v16 = vsub.s32 0, %v15
  %v17 = vrot.slane %v12, %v16
  %v18 = vlaneseq
  %v19 = vshrl.u32 %v18, 7
  %v20 = vsub.s32 1, %v19
  %v21 = vrot.slane %v12, %v20
  %v22 = vlaneseq
  %v23 = vshrl.u32 %v22, 7
  %v24 = vsub.s32 2, %v23
  %v25 = vrot.slane %v12, %v24
  %v26 = vcombine.low %v17, %v21
  %v28 = vunpack.c.l.s4 1983009808
  %v29 = vunpack.c.0.s8 %v28
  %v30 = vlaneseq
  %v31 = vshrl.u32 %v30, 7
  %v32 = vsub.s32 %v29, %v31
  %v33 = vrot.slane %v26, %v32
  %v35 = vunpack.c.l.s4 1983009808
  %v36 = vunpack.c.0.s8 %v35
  %v37 = vlaneseq
  %v38 = vshrl.u32 %v37, 7
  %v39 = vsub.s32 %v36, %v38
  %v40 = vrot.slane %v25, %v39
  %v41 = vcombine.low %v33, %v40
  %v43 = vmul.f32 %v11, %v41
  %v45 = vcombine.high %v43, %v43
  %v47 = vunpack.c.l.s4 1983009808
  %v48 = vunpack.c.0.s8 %v47
  %v49 = vlaneseq
  %v50 = vshrl.u32 %v49, 7
  %v51 = vsub.s32 %v48, %v50
  %v52 = vrot.slane %v43, %v51
  %v54 = vunpack.c.l.s4 1983009808
  %v55 = vunpack.c.0.s8 %v54
  %v56 = vlaneseq
  %v57 = vshrl.u32 %v56, 7
  %v58 = vsub.s32 %v55, %v57
  %v59 = vrot.slane %v45, %v58
  %v60 = vcombine.high %v52, %v52
  %vm64 = vcmask 1041408
  %v65 = vsel %vm64, %v52, 0.0
  %v66 = vsel %vm64, %v60, 0.0
  %v67 = vadd.f32 %v65, %v66
  %vm68 = vcmask 517120
  %v69 = vsel %vm68, %v59, 0.0
  %v70 = vadd.f32 %v67, %v69
  %71 = vadd.xlane.f32.xlu0 %v70
  %v72 = vpop.xlane.xlu0 %71
  %v73 = vmax.f32 %v72, 0.0
  %s74 = scalar_lea.vmem %s1, 24
  %v75 = vld [vmem:[%s74] ss:$8 sm:$0x7]
  %v77 = vlaneseq
  %v78 = vshrl.u32 %v77, 7
  %v79 = vsub.s32 0, %v78
  %v80 = vrot.slane %v75, %v79
  %v81 = vlaneseq
  %v82 = vshrl.u32 %v81, 7
  %v83 = vsub.s32 1, %v82
  %v84 = vrot.slane %v75, %v83
  %v85 = vlaneseq
  %v86 = vshrl.u32 %v85, 7
  %v87 = vsub.s32 2, %v86
  %v88 = vrot.slane %v75, %v87
  %v92 = vmul.f32 %v73, %v80
  %v93 = vmul.f32 %v73, %v84
  %v94 = vmul.f32 %v73, %v88
  %s95 = scalar_lea.vmem %s1, 1
  %v96 = vld [vmem:[%s95] ss:$8 sm:$0x7]
  %v98 = vlaneseq
  %v99 = vshrl.u32 %v98, 7
  %v100 = vsub.s32 0, %v99
  %v101 = vrot.slane %v96, %v100
  %v102 = vlaneseq
  %v103 = vshrl.u32 %v102, 7
  %v104 = vsub.s32 1, %v103
  %v105 = vrot.slane %v96, %v104
  %v106 = vlaneseq
  %v107 = vshrl.u32 %v106, 7
  %v108 = vsub.s32 2, %v107
  %v109 = vrot.slane %v96, %v108
  %v110 = vcombine.low %v101, %v105
  %v112 = vunpack.c.l.s4 1983009808
  %v113 = vunpack.c.0.s8 %v112
  %v114 = vlaneseq
  %v115 = vshrl.u32 %v114, 7
  %v116 = vsub.s32 %v113, %v115
  %v117 = vrot.slane %v110, %v116
  %v119 = vunpack.c.l.s4 1983009808
  %v120 = vunpack.c.0.s8 %v119
  %v121 = vlaneseq
  %v122 = vshrl.u32 %v121, 7
  %v123 = vsub.s32 %v120, %v122
  %v124 = vrot.slane %v109, %v123
  %v125 = vcombine.low %v117, %v124
  %v127 = vmul.f32 %v11, %v125
  %v129 = vcombine.high %v127, %v127
  %v131 = vunpack.c.l.s4 1983009808
  %v132 = vunpack.c.0.s8 %v131
  %v133 = vlaneseq
  %v134 = vshrl.u32 %v133, 7
  %v135 = vsub.s32 %v132, %v134
  %v136 = vrot.slane %v127, %v135
  %v138 = vunpack.c.l.s4 1983009808
  %v139 = vunpack.c.0.s8 %v138
  %v140 = vlaneseq
  %v141 = vshrl.u32 %v140, 7
  %v142 = vsub.s32 %v139, %v141
  %v143 = vrot.slane %v129, %v142
  %v144 = vcombine.high %v136, %v136
  %v148 = vsel %vm64, %v136, 0.0
  %v149 = vsel %vm64, %v144, 0.0
  %v150 = vadd.f32 %v148, %v149
  %v151 = vsel %vm68, %v143, 0.0
  %v152 = vadd.f32 %v150, %v151
  %153 = vadd.xlane.f32.xlu0 %v152
  %v154 = vpop.xlane.xlu0 %153
  %v155 = vmax.f32 %v154, 0.0
  %s156 = scalar_lea.vmem %s1, 25
  %v157 = vld [vmem:[%s156] ss:$8 sm:$0x7]
  %v159 = vlaneseq
  %v160 = vshrl.u32 %v159, 7
  %v161 = vsub.s32 0, %v160
  %v162 = vrot.slane %v157, %v161
  %v163 = vlaneseq
  %v164 = vshrl.u32 %v163, 7
  %v165 = vsub.s32 1, %v164
  %v166 = vrot.slane %v157, %v165
  %v167 = vlaneseq
  %v168 = vshrl.u32 %v167, 7
  %v169 = vsub.s32 2, %v168
  %v170 = vrot.slane %v157, %v169
  %v174 = vmul.f32 %v155, %v162
  %v175 = vmul.f32 %v155, %v166
  %v176 = vmul.f32 %v155, %v170
  %v177 = vadd.f32 %v92, %v174
  %v178 = vadd.f32 %v93, %v175
  %v179 = vadd.f32 %v94, %v176
  %v180 = vxor.u32 %v177, 2147483648
  %v181 = vxor.u32 %v178, 2147483648
  %v182 = vxor.u32 %v179, 2147483648
  %v183 = vmul.f32 %v180, 1.442695
  %v184 = vpow.pop %v183
  %v185 = vmul.f32 %v181, 1.442695
  %v186 = vpow.pop %v185
  %v187 = vmul.f32 %v182, 1.442695
  %v188 = vpow.pop %v187
  %v189 = vadd.f32 %v184, 1.0
  %v190 = vadd.f32 %v186, 1.0
  %v191 = vadd.f32 %v188, 1.0
  %v192 = vrcp.pop %v189
  %v193 = vmul.f32 1.0, %v192
  %v194 = vrcp.pop %v190
  %v195 = vmul.f32 1.0, %v194
  %v196 = vrcp.pop %v191
  %v197 = vmul.f32 1.0, %v196
  %v201 = vcombine.low %v193, %v195
  %v203 = vunpack.c.l.s4 1983009808
  %v204 = vunpack.c.0.s8 %v203
  %v205 = vlaneseq
  %v206 = vshrl.u32 %v205, 7
  %v207 = vsub.s32 %v204, %v206
  %v208 = vrot.slane %v201, %v207
  %v210 = vunpack.c.l.s4 1983009808
  %v211 = vunpack.c.0.s8 %v210
  %v212 = vlaneseq
  %v213 = vshrl.u32 %v212, 7
  %v214 = vsub.s32 %v211, %v213
  %v215 = vrot.slane %v197, %v214
  %v216 = vcombine.low %v208, %v215
  %v218 = vmul.f32 %v11, %v216
  %s219 = scalar_lea.vmem %s1, 48
  %v220 = vld [vmem:[%s219] ss:$8 sm:$0x7]
  %v222 = vlaneseq
  %v223 = vshrl.u32 %v222, 7
  %v224 = vsub.s32 0, %v223
  %v225 = vrot.slane %v220, %v224
  %v226 = vlaneseq
  %v227 = vshrl.u32 %v226, 7
  %v228 = vsub.s32 1, %v227
  %v229 = vrot.slane %v220, %v228
  %v230 = vlaneseq
  %v231 = vshrl.u32 %v230, 7
  %v232 = vsub.s32 2, %v231
  %v233 = vrot.slane %v220, %v232
  %v234 = vcombine.low %v225, %v229
  %v236 = vunpack.c.l.s4 1983009808
  %v237 = vunpack.c.0.s8 %v236
  %v238 = vlaneseq
  %v239 = vshrl.u32 %v238, 7
  %v240 = vsub.s32 %v237, %v239
  %v241 = vrot.slane %v234, %v240
  %v243 = vunpack.c.l.s4 1983009808
  %v244 = vunpack.c.0.s8 %v243
  %v245 = vlaneseq
  %v246 = vshrl.u32 %v245, 7
  %v247 = vsub.s32 %v244, %v246
  %v248 = vrot.slane %v233, %v247
  %v249 = vcombine.low %v241, %v248
  %v251 = vmul.f32 %v218, %v249
  %v253 = vcombine.high %v251, %v251
  %v255 = vunpack.c.l.s4 1983009808
  %v256 = vunpack.c.0.s8 %v255
  %v257 = vlaneseq
  %v258 = vshrl.u32 %v257, 7
  %v259 = vsub.s32 %v256, %v258
  %v260 = vrot.slane %v251, %v259
  %v262 = vunpack.c.l.s4 1983009808
  %v263 = vunpack.c.0.s8 %v262
  %v264 = vlaneseq
  %v265 = vshrl.u32 %v264, 7
  %v266 = vsub.s32 %v263, %v265
  %v267 = vrot.slane %v253, %v266
  %v268 = vcombine.high %v260, %v260
  %v272 = vsel %vm64, %v260, 0.0
  %v273 = vsel %vm64, %v268, 0.0
  %v274 = vadd.f32 %v272, %v273
  %v275 = vsel %vm68, %v267, 0.0
  %v276 = vadd.f32 %v274, %v275
  %277 = vadd.xlane.f32.xlu0 %v276
  %v278 = vpop.xlane.xlu0 %277
  %v279 = vmax.f32 %v278, 0.0
  %s280 = scalar_lea.vmem %s1, 72
  %v281 = vld [vmem:[%s280] ss:$8 sm:$0x7]
  %v283 = vlaneseq
  %v284 = vshrl.u32 %v283, 7
  %v285 = vsub.s32 0, %v284
  %v286 = vrot.slane %v281, %v285
  %v287 = vlaneseq
  %v288 = vshrl.u32 %v287, 7
  %v289 = vsub.s32 1, %v288
  %v290 = vrot.slane %v281, %v289
  %v291 = vlaneseq
  %v292 = vshrl.u32 %v291, 7
  %v293 = vsub.s32 2, %v292
  %v294 = vrot.slane %v281, %v293
  %v298 = vmul.f32 %v279, %v286
  %v299 = vmul.f32 %v279, %v290
  %v300 = vmul.f32 %v279, %v294
  %s301 = scalar_lea.vmem %s1, 49
  %v302 = vld [vmem:[%s301] ss:$8 sm:$0x7]
  %v304 = vlaneseq
  %v305 = vshrl.u32 %v304, 7
  %v306 = vsub.s32 0, %v305
  %v307 = vrot.slane %v302, %v306
  %v308 = vlaneseq
  %v309 = vshrl.u32 %v308, 7
  %v310 = vsub.s32 1, %v309
  %v311 = vrot.slane %v302, %v310
  %v312 = vlaneseq
  %v313 = vshrl.u32 %v312, 7
  %v314 = vsub.s32 2, %v313
  %v315 = vrot.slane %v302, %v314
  %v316 = vcombine.low %v307, %v311
  %v318 = vunpack.c.l.s4 1983009808
  %v319 = vunpack.c.0.s8 %v318
  %v320 = vlaneseq
  %v321 = vshrl.u32 %v320, 7
  %v322 = vsub.s32 %v319, %v321
  %v323 = vrot.slane %v316, %v322
  %v325 = vunpack.c.l.s4 1983009808
  %v326 = vunpack.c.0.s8 %v325
  %v327 = vlaneseq
  %v328 = vshrl.u32 %v327, 7
  %v329 = vsub.s32 %v326, %v328
  %v330 = vrot.slane %v315, %v329
  %v331 = vcombine.low %v323, %v330
  %v333 = vmul.f32 %v218, %v331
  %v335 = vcombine.high %v333, %v333
  %v337 = vunpack.c.l.s4 1983009808
  %v338 = vunpack.c.0.s8 %v337
  %v339 = vlaneseq
  %v340 = vshrl.u32 %v339, 7
  %v341 = vsub.s32 %v338, %v340
  %v342 = vrot.slane %v333, %v341
  %v344 = vunpack.c.l.s4 1983009808
  %v345 = vunpack.c.0.s8 %v344
  %v346 = vlaneseq
  %v347 = vshrl.u32 %v346, 7
  %v348 = vsub.s32 %v345, %v347
  %v349 = vrot.slane %v335, %v348
  %v350 = vcombine.high %v342, %v342
  %v354 = vsel %vm64, %v342, 0.0
  %v355 = vsel %vm64, %v350, 0.0
  %v356 = vadd.f32 %v354, %v355
  %v357 = vsel %vm68, %v349, 0.0
  %v358 = vadd.f32 %v356, %v357
  %359 = vadd.xlane.f32.xlu0 %v358
  %v360 = vpop.xlane.xlu0 %359
  %v361 = vmax.f32 %v360, 0.0
  %s362 = scalar_lea.vmem %s1, 73
  %v363 = vld [vmem:[%s362] ss:$8 sm:$0x7]
  %v365 = vlaneseq
  %v366 = vshrl.u32 %v365, 7
  %v367 = vsub.s32 0, %v366
  %v368 = vrot.slane %v363, %v367
  %v369 = vlaneseq
  %v370 = vshrl.u32 %v369, 7
  %v371 = vsub.s32 1, %v370
  %v372 = vrot.slane %v363, %v371
  %v373 = vlaneseq
  %v374 = vshrl.u32 %v373, 7
  %v375 = vsub.s32 2, %v374
  %v376 = vrot.slane %v363, %v375
  %v380 = vmul.f32 %v361, %v368
  %v381 = vmul.f32 %v361, %v372
  %v382 = vmul.f32 %v361, %v376
  %v383 = vadd.f32 %v298, %v380
  %v384 = vadd.f32 %v299, %v381
  %v385 = vadd.f32 %v300, %v382
  %v386 = vxor.u32 %v383, 2147483648
  %v387 = vxor.u32 %v384, 2147483648
  %v388 = vxor.u32 %v385, 2147483648
  %v389 = vmul.f32 %v386, 1.442695
  %v390 = vpow.pop %v389
  %v391 = vmul.f32 %v387, 1.442695
  %v392 = vpow.pop %v391
  %v393 = vmul.f32 %v388, 1.442695
  %v394 = vpow.pop %v393
  %v395 = vadd.f32 %v390, 1.0
  %v396 = vadd.f32 %v392, 1.0
  %v397 = vadd.f32 %v394, 1.0
  %v398 = vrcp.pop %v395
  %v399 = vmul.f32 1.0, %v398
  %v400 = vrcp.pop %v396
  %v401 = vmul.f32 1.0, %v400
  %v402 = vrcp.pop %v397
  %v403 = vmul.f32 1.0, %v402
  %v407 = vcombine.low %v399, %v401
  %v409 = vunpack.c.l.s4 1983009808
  %v410 = vunpack.c.0.s8 %v409
  %v411 = vlaneseq
  %v412 = vshrl.u32 %v411, 7
  %v413 = vsub.s32 %v410, %v412
  %v414 = vrot.slane %v407, %v413
  %v416 = vunpack.c.l.s4 1983009808
  %v417 = vunpack.c.0.s8 %v416
  %v418 = vlaneseq
  %v419 = vshrl.u32 %v418, 7
  %v420 = vsub.s32 %v417, %v419
  %v421 = vrot.slane %v403, %v420
  %v422 = vcombine.low %v414, %v421
  %v424 = vmul.f32 %v218, %v422
  %vm425 = vcmask 1043458
  %vm426 = vmor %vm425, %vm64
  %vm427 = vcmask 521220
  %vm428 = vmor %vm427, %vm426
  %429 = vst.msk [vmem:[%s2] sm:$0x3f] %vm428, %v424
  // Predicated region
  $region10: #{forward.1} parent=0 // pred_check
    _
  $region11: #{forward.1} parent=0 // pred_check_branch
    %431 = sbr.rel (0) target = $region13
  $region12: #{forward.1} parent=0 // pred_region
    _
  $region13: #{forward.1} parent=0 // pred_fallthru
    _
  // Predicated region
  $region14: #{forward.1} parent=0 // pred_check
    _
  $region15: #{forward.1} parent=0 // pred_check_branch
    %433 = sbr.rel (0) target = $region17
  $region16: #{forward.1} parent=0 // pred_region
    _
  $region17: #{forward.1} parent=0 // pred_fallthru
    _

</llo_original>
